<compile_context>
chip_gen: v7x
topology: tpu7x:2x2x1
jax: 0.10.0
libtpu: 0.0.40
codegen_flags: <defaults>
</compile_context>

<pallas_src>
import jax
import jax.numpy as jnp
from jax.experimental import pallas as pl
from jax.experimental.pallas import tpu as pltpu

BN_EPS = 1e-5


def fc_bn_kernel(x_ref, w_ref, gb_ref, o_ref, acc_ref):
    k = pl.program_id(1)

    @pl.when(k == 0)
    def _():
        acc_ref[...] = jnp.zeros_like(acc_ref)

    # Linear (bias omitted: cancelled exactly by the BN mean subtraction).
    # Operands are streamed in bf16; accumulation is f32 in the VMEM scratch.
    acc_ref[...] += jnp.dot(x_ref[...], w_ref[...], preferred_element_type=jnp.float32)

    @pl.when(k == pl.num_programs(1) - 1)
    def _():
        y = acc_ref[...]
        # BatchNorm1d, training mode: batch statistics, biased variance (two-pass, f32).
        inv_b = 1.0 / y.shape[0]
        mean = jnp.sum(y, axis=0, keepdims=True) * inv_b
        centered = y - mean
        var = jnp.sum(centered * centered, axis=0, keepdims=True) * inv_b
        scale = gb_ref[0:1, :] * jax.lax.rsqrt(var + BN_EPS)   # gamma folded into inv_std
        out = centered * scale + gb_ref[1:2, :]                # + beta
        # activation=None, dropout=None in the default module configuration.
        o_ref[...] = out.astype(o_ref.dtype)


def _round_up(x, m):
    return ((x + m - 1) // m) * m


def _vmem_budgets():
    """Generation-aware scoped-VMEM limit and per-step tile footprint budget."""
    try:
        cap = pltpu.get_tpu_info().vmem_capacity_bytes
    except Exception:
        cap = 64 * 1024 * 1024          # conservative (v7x per-TC) fallback
    limit = min(max(cap * 3 // 4, 32 << 20), 96 << 20)   # v7x: 48 MiB; v5e/v6e: 96 MiB
    budget = min(limit * 2 // 3, 64 << 20)                # v7x: 32 MiB; v5e/v6e: 64 MiB
    return int(limit), int(budget)


def _footprint_bytes(B, tk, tn, x_item, w_item, out_item):
    x_bytes = 2 * B * tk * x_item       # x block (inputs are double-buffered regardless of index_map)
    w_bytes = 2 * tk * tn * w_item      # double-buffered weight tile
    gb_bytes = 2 * 2 * tn * 4           # double-buffered gamma/beta tile
    out_bytes = 2 * B * tn * out_item   # double-buffered output tile
    acc_bytes = B * tn * 4              # f32 accumulator scratch
    tmp_bytes = 3 * B * tn * 4          # in-kernel f32 temporaries (y/centered/out)
    return x_bytes + w_bytes + gb_bytes + out_bytes + acc_bytes + tmp_bytes


def _pick_tiles(B, K, N, x_item, w_item, out_item, budget):
    """Lane-dense (128-multiple) N tile + K tile that fit the per-step VMEM budget."""

    def fits(tk, tn):
        return _footprint_bytes(B, tk, tn, x_item, w_item, out_item) <= budget

    n_blocks = pl.cdiv(N, 128)
    tn = min(n_blocks * 128, 4096)
    if n_blocks >= 2:
        # Guarantee >= 2 N-steps so the "parallel" axis shards across both v7x TensorCores.
        tn = min(tn, pl.cdiv(n_blocks, 2) * 128)

    tk = K                               # keep the whole contraction resident if it fits
    if not fits(tk, tn):
        # Large K: tile the contraction (128-multiples) so tn can stay large and lane-dense.
        tk = min(_round_up(K, 128), 2048)
        while tk > 128 and not fits(tk, tn):
            tk -= 128
    while tn > 128 and not fits(tk, tn):
        tn -= 128
    return tn, tk


def fully_connected_block(x, w, b, gamma, beta, *, matmul_dtype=jnp.bfloat16,
                          out_dtype=jnp.float32):
    """Linear(in_size, out_size, bias=True) -> BatchNorm1d(out_size), training-mode stats.

    x: (B, in_size); w: (in_size, out_size); b/gamma/beta: (1, out_size).
    `b` is accepted for parity with the PyTorch module but never used: BN's mean subtraction
    cancels a per-feature constant bias exactly.
    """
    del b  # mathematically redundant under BatchNorm (mean(y + b) = mean(y) + b)
    B, K = x.shape
    N = w.shape[1]

    # Stream matmul operands in reduced precision (halves the dominant W HBM traffic).
    if matmul_dtype is not None:
        x = x.astype(matmul_dtype)
        w = w.astype(matmul_dtype)

    vmem_limit, tile_budget = _vmem_budgets()
    out_item = jnp.dtype(out_dtype).itemsize
    tn, tk = _pick_tiles(B, K, N, x.dtype.itemsize, w.dtype.itemsize, out_item, tile_budget)

    n_tiles = pl.cdiv(N, tn)
    k_tiles = pl.cdiv(K, tk)
    N_pad = n_tiles * tn
    K_pad = k_tiles * tk

    # Zero-pad to tile boundaries (exact: zero columns/rows contribute nothing; the padded
    # output region is sliced off).  gamma/beta are fused into one (2, N_pad) array so each
    # grid step issues a single small DMA instead of two.
    if K_pad > K:
        x = jnp.pad(x, ((0, 0), (0, K_pad - K)))
        w = jnp.pad(w, ((0, K_pad - K), (0, 0)))
    gb = jnp.concatenate([gamma.astype(jnp.float32), beta.astype(jnp.float32)], axis=0)
    if N_pad > N:
        w = jnp.pad(w, ((0, 0), (0, N_pad - N)))
        gb = jnp.pad(gb, ((0, 0), (0, N_pad - N)))

    cost = pl.CostEstimate(
        flops=2 * B * K_pad * N_pad,
        transcendentals=N_pad,
        bytes_accessed=(B * K_pad * x.dtype.itemsize
                        + K_pad * N_pad * w.dtype.itemsize
                        + 2 * N_pad * 4
                        + B * N_pad * out_item),
    )

    out_padded = pl.pallas_call(
        fc_bn_kernel,
        out_shape=jax.ShapeDtypeStruct((B, N_pad), out_dtype),
        grid=(n_tiles, k_tiles),
        in_specs=[
            pl.BlockSpec((B, tk), lambda j, k: (0, k)),    # x: streamed over K only
            pl.BlockSpec((tk, tn), lambda j, k: (k, j)),   # W tile: the dominant HBM stream
            pl.BlockSpec((2, tn), lambda j, k: (0, j)),    # fused gamma/beta tile
        ],
        out_specs=pl.BlockSpec((B, tn), lambda j, k: (0, j)),
        scratch_shapes=[pltpu.VMEM((B, tn), jnp.float32)],  # f32 accumulator across K steps
        compiler_params=pltpu.CompilerParams(
            dimension_semantics=("parallel", "arbitrary"),  # N sharded across TCs, K reduction
            vmem_limit_bytes=vmem_limit,
        ),
        cost_estimate=cost,
    )(x, w, gb)

    return out_padded[:, :N] if N_pad > N else out_padded


def reference(x, w, b, gamma, beta, matmul_dtype=jnp.bfloat16):
    """Pure-JAX reference INCLUDING the linear bias (proves the cancellation is exact) and
    using the same reduced-precision matmul operands / f32 accumulation as the kernel."""
    if matmul_dtype is not None:
        x = x.astype(matmul_dtype)
        w = w.astype(matmul_dtype)
    y = jnp.dot(x, w, preferred_element_type=jnp.float32) + b
    mean = y.mean(0, keepdims=True)
    var = ((y - mean) ** 2).mean(0, keepdims=True)
    return gamma * (y - mean) / jnp.sqrt(var + BN_EPS) + beta


if __name__ == "__main__":
    # out_size deliberately not a multiple of 128: exercises the pad-to-lane-dense path and
    # a 2-step (both-TensorCore) N grid.
    B, in_size, out_size = 8, 32, 200

    key = jax.random.PRNGKey(0)
    kx, kw, kb, kg, kbe = jax.random.split(key, 5)

    x = jax.random.normal(kx, (B, in_size), dtype=jnp.float32)
    bound = in_size ** -0.5
    w = jax.random.uniform(kw, (in_size, out_size), minval=-bound, maxval=bound, dtype=jnp.float32)
    b = jax.random.uniform(kb, (1, out_size), minval=-bound, maxval=bound, dtype=jnp.float32)
    gamma = 1.0 + 0.1 * jax.random.normal(kg, (1, out_size), dtype=jnp.float32)
    beta = 0.1 * jax.random.normal(kbe, (1, out_size), dtype=jnp.float32)

    out = jax.block_until_ready(fully_connected_block(x, w, b, gamma, beta))

    ref = reference(x, w, b, gamma, beta)
    assert out.shape == (B, out_size)
    assert jnp.allclose(out, ref, atol=1e-3, rtol=1e-3), "mismatch vs pure-JAX reference"

    print("KERNEL_OK")
</pallas_src>

<mosaic_0001>
module attributes {stable_mosaic.version = 11 : i64} {
  func.func @fc_bn_kernel(%arg0: i32, %arg1: i32, %arg2: memref<8x32xbf16, #tpu.memory_space<vmem>>, %arg3: memref<32x128xbf16, #tpu.memory_space<vmem>>, %arg4: memref<2x128xf32, #tpu.memory_space<vmem>>, %arg5: memref<8x128xf32, #tpu.memory_space<vmem>>, %arg6: memref<8x128xf32, #tpu.memory_space<vmem>>) attributes {dimension_semantics = [#tpu.dimension_semantics<parallel>, #tpu.dimension_semantics<arbitrary>], iteration_bounds = array<i64: 2, 1>, scalar_prefetch = 0 : i64, scratch_operands = 1 : i64, tpu.core_type = #tpu.core_type<tc>, window_params = [{transform_indices = @transform_0, window_bounds = array<i64: 8, 32>}, {transform_indices = @transform_1, window_bounds = array<i64: 32, 128>}, {transform_indices = @transform_2, window_bounds = array<i64: 2, 128>}, {transform_indices = @transform_3, window_bounds = array<i64: 8, 128>}]} {
    %c0_i32 = arith.constant 0 : i32
    %0 = arith.cmpi eq, %arg1, %c0_i32 : i32
    %1 = arith.extui %0 : i1 to i32
    %c0_i32_0 = arith.constant 0 : i32
    %2 = arith.cmpi ne, %1, %c0_i32_0 : i32
    scf.if %2 {
      %cst_10 = arith.constant 0.000000e+00 : f32
      %12 = vector.broadcast %cst_10 : f32 to vector<8x128xf32>
      %c0_11 = arith.constant 0 : index
      %c0_12 = arith.constant 0 : index
      %13 = vector.load %arg6[%c0_11, %c0_12] : memref<8x128xf32, #tpu.memory_space<vmem>>, vector<8x128xf32>
      tpu.vector_store %arg6[%c0_11, %c0_12], %12 {strides = array<i32>} : memref<8x128xf32, #tpu.memory_space<vmem>>, vector<8x128xf32>,
    } else {
    }
    %c0 = arith.constant 0 : index
    %c0_1 = arith.constant 0 : index
    %3 = vector.load %arg6[%c0, %c0_1] : memref<8x128xf32, #tpu.memory_space<vmem>>, vector<8x128xf32>
    %c0_2 = arith.constant 0 : index
    %c0_3 = arith.constant 0 : index
    %4 = vector.load %arg2[%c0_2, %c0_3] : memref<8x32xbf16, #tpu.memory_space<vmem>>, vector<8x32xbf16>
    %c0_4 = arith.constant 0 : index
    %c0_5 = arith.constant 0 : index
    %5 = vector.load %arg3[%c0_4, %c0_5] : memref<32x128xbf16, #tpu.memory_space<vmem>>, vector<32x128xbf16>
    %cst = arith.constant dense<0.000000e+00> : vector<8x128xf32>
    %6 = tpu.matmul %4, %5, %cst {dimension_numbers = #tpu.dot_dimension_numbers<[1], [0], [0], [1], [0, 0, 1, 1], [], []>} : vector<8x32xbf16>, vector<32x128xbf16>, vector<8x128xf32> -> vector<8x128xf32>
    %7 = arith.addf %3, %6 : vector<8x128xf32>
    %c0_6 = arith.constant 0 : index
    %c0_7 = arith.constant 0 : index
    %8 = vector.load %arg6[%c0_6, %c0_7] : memref<8x128xf32, #tpu.memory_space<vmem>>, vector<8x128xf32>
    tpu.vector_store %arg6[%c0_6, %c0_7], %7 {strides = array<i32>} : memref<8x128xf32, #tpu.memory_space<vmem>>, vector<8x128xf32>,
    %c0_i32_8 = arith.constant 0 : i32
    %9 = arith.cmpi eq, %arg1, %c0_i32_8 : i32
    %10 = arith.extui %9 : i1 to i32
    %c0_i32_9 = arith.constant 0 : i32
    %11 = arith.cmpi ne, %10, %c0_i32_9 : i32
    scf.if %11 {
      %c0_10 = arith.constant 0 : index
      %c0_11 = arith.constant 0 : index
      %12 = vector.load %arg6[%c0_10, %c0_11] : memref<8x128xf32, #tpu.memory_space<vmem>>, vector<8x128xf32>
      %cst_12 = arith.constant dense<0.000000e+00> : vector<128xf32>
      %13 = vector.multi_reduction <add>, %12, %cst_12 [0] : vector<8x128xf32> to vector<128xf32>
      %14 = vector.shape_cast %13 : vector<128xf32> to vector<1x128xf32>
      %cst_13 = arith.constant 1.250000e-01 : f32
      %15 = vector.broadcast %cst_13 : f32 to vector<1x128xf32>
      %16 = arith.mulf %14, %15 : vector<1x128xf32>
      %17 = vector.broadcast %16 : vector<1x128xf32> to vector<8x128xf32>
      %18 = arith.subf %12, %17 : vector<8x128xf32>
      %19 = arith.mulf %18, %18 : vector<8x128xf32>
      %cst_14 = arith.constant dense<0.000000e+00> : vector<128xf32>
      %20 = vector.multi_reduction <add>, %19, %cst_14 [0] : vector<8x128xf32> to vector<128xf32>
      %21 = vector.shape_cast %20 : vector<128xf32> to vector<1x128xf32>
      %cst_15 = arith.constant 1.250000e-01 : f32
      %22 = vector.broadcast %cst_15 : f32 to vector<1x128xf32>
      %23 = arith.mulf %21, %22 : vector<1x128xf32>
      %c0_16 = arith.constant 0 : index
      %c0_17 = arith.constant 0 : index
      %24 = vector.load %arg4[%c0_16, %c0_17] : memref<2x128xf32, #tpu.memory_space<vmem>>, vector<1x128xf32>
      %cst_18 = arith.constant 9.99999974E-6 : f32
      %25 = vector.broadcast %cst_18 : f32 to vector<1x128xf32>
      %26 = arith.addf %23, %25 : vector<1x128xf32>
      %27 = math.rsqrt %26 : vector<1x128xf32>
      %28 = arith.mulf %24, %27 : vector<1x128xf32>
      %29 = vector.broadcast %28 : vector<1x128xf32> to vector<8x128xf32>
      %30 = arith.mulf %18, %29 : vector<8x128xf32>
      %c1 = arith.constant 1 : index
      %c0_19 = arith.constant 0 : index
      %31 = vector.load %arg4[%c1, %c0_19] : memref<2x128xf32, #tpu.memory_space<vmem>>, vector<1x128xf32>
      %32 = vector.broadcast %31 : vector<1x128xf32> to vector<8x128xf32>
      %33 = arith.addf %30, %32 : vector<8x128xf32>
      %c0_20 = arith.constant 0 : index
      %c0_21 = arith.constant 0 : index
      %34 = vector.load %arg5[%c0_20, %c0_21] : memref<8x128xf32, #tpu.memory_space<vmem>>, vector<8x128xf32>
      tpu.vector_store %arg5[%c0_20, %c0_21], %33 {strides = array<i32>} : memref<8x128xf32, #tpu.memory_space<vmem>>, vector<8x128xf32>,
    } else {
    }
    return
  }
  func.func @transform_0(%arg0: i32, %arg1: i32) -> (i32, i32) {
    %c0_i32 = arith.constant 0 : i32
    %c0_i32_0 = arith.constant 0 : i32
    return %c0_i32, %arg1 : i32, i32
  }
  func.func @transform_1(%arg0: i32, %arg1: i32) -> (i32, i32) {
    %c0_i32 = arith.constant 0 : i32
    return %arg1, %arg0 : i32, i32
  }
  func.func @transform_2(%arg0: i32, %arg1: i32) -> (i32, i32) {
    %c0_i32 = arith.constant 0 : i32
    %c0_i32_0 = arith.constant 0 : i32
    return %c0_i32, %arg0 : i32, i32
  }
  func.func @transform_3(%arg0: i32, %arg1: i32) -> (i32, i32) {
    %c0_i32 = arith.constant 0 : i32
    %c0_i32_0 = arith.constant 0 : i32
    return %c0_i32, %arg0 : i32, i32
  }
}

</mosaic_0001>

<llo_original>
// kernel: tpu_custom_call.1
$region0: #{tpu_custom_call.1}
  #allocation0 [shape = 'u32[]', space=smem, size = 0x4, offset = 0x4, fixed_abs, tag = 'smem constant byte address 0x4 - core index']
  #allocation1 [shape = 'u32[144,128]{1,0:T(1,128)}', space=vmem, size = 0x12000, scoped, tag = 'internal scratch']
  #allocation2 [shape = 'f32[8,128]{1,0:T(8,128)}', space=vmem, size = 0x1000, scoped, tag = 'scratch operand']
  %s0 = inlined_call_operand.hbm [shape: bf16[8,32], index: 0, kind: input, shape index: {}]
  %s1 = inlined_call_operand.hbm [shape: bf16[32,256], index: 1, kind: input, shape index: {}]
  %s2 = inlined_call_operand.vmem [shape: f32[2,256], index: 2, kind: input, shape index: {}]
  %s3 = inlined_call_operand.hbm [shape: f32[8,256], index: 3, kind: output, shape index: {}]
  %s4 = sld [smem:[#allocation0]]
  $region61: #{tpu_custom_call.1} parent=0
    _
  %s6 = ssub.s32 1, %s4
  %s7 = scalar_select 0, %s6, %s4
  $region1: #{tpu_custom_call.1} parent=0
    #allocation3 [shape = 'u8[2048]{0}', space=vmem, size = 0x800, scoped, tag = 'input window, operand 0, single buffered']
    #allocation4 [shape = 's32[2]{0}', space=sflag, size = 0x8, scoped, tag = 'scoped memory for tpu_custom_call.1']
    #allocation5 [shape = 's32[2]{0}', space=sflag, size = 0x8, scoped, tag = 'scoped memory for tpu_custom_call.1']
    #allocation6 [shape = 'u8[16384]{0}', space=vmem, size = 0x4000, scoped, tag = 'input window, operand 1']
    #allocation7 [shape = 's32[2]{0}', space=sflag, size = 0x8, scoped, tag = 'scoped memory for tpu_custom_call.1']
    #allocation8 [shape = 'u8[8192]{0}', space=vmem, size = 0x2000, scoped, tag = 'output window, operand 0']
    %8 = vsyncpa [#allocation4], 0
    %9 = vsyncpa [#allocation7], 0
    %s10 = scalar_lea.sflag [#allocation7], 1
    %11 = vsyncpa %s10, 0
    %12 = vsyncpa [#allocation5], 0
    %s13 = scalar_lea.sflag [#allocation5], 1
    %14 = vsyncpa %s13, 0
    loop: start=0, step=1, limit=4
    $region2: #{tpu_custom_call.1} parent=1 // loop_pre_header
      _
    $region3: #{tpu_custom_call.1} parent=1 // loop_header
      %s16 = sphi 0, %s20
      %p17 = scmp.ge.s32.totalorder %s16, 4
      %s23 = sphi 0, %s35
      %s24 = sphi 0, %s31
      %s25 = sphi 0, %s23
      %s26 = sphi 0, %s24
      %s27 = sphi 0, %s25
      %s28 = sphi 0, %s26
      %s38 = sphi 0, %s40
      %s41 = sphi 0, %s38
      %s42 = sphi 0, %s41
      %s58 = sphi 0, %s42
      %s66 = sphi 0, %s68
      %s69 = sphi 0, %s66
      %s70 = sphi 0, %s69
      %s86 = sphi 0, %s70
      %s92 = sphi 0, %s94
      %s95 = sphi 0, %s92
      %s96 = sphi 0, %s95
      %s112 = sphi 0, %s96
      %s118 = sphi 0, %s120
      %s121 = sphi 0, %s118
      %s122 = sphi 0, %s121
      %s138 = sphi 0, %s122
    $region4: #{tpu_custom_call.1} parent=1 // loop_header_branch
      %19 = sbr.rel (%p17) target = $region8
    $region5: #{tpu_custom_call.1} parent=1 // loop_body
      %s21 = ssub.s32 %s16, 1
      %s22 = ssub.s32 %s16, 2
      %s29 = sadd.s32 1, %s24
      %p30 = scmp.ge.s32.totalorder %s29, 1
      %s31 = scalar_select %p30, 0, %s29
      %s32 = sadd.s32 1, %s23
      %s33 = scalar_select %p30, %s32, %s23
      %p34 = scmp.ge.s32.totalorder %s33, 2
      %s35 = scalar_select %p34, 0, %s33
      %s36 = ssub.s32 %s24, %s31
      %p37 = scmp.eq.s32.totalorder %s36, 0
      %s39 = sadd.s32 %s38, 1
      %s40 = scalar_select %p37, %s38, %s39
      %p43 = pneg %p37
      %p44 = scmp.eq.s32.totalorder %s16, 1
      %p45 = por %p43, %p44
      %p46 = scmp.ne.s32.totalorder %s38, %s41
      %p47 = scmp.eq.s32.totalorder %s16, 0
      %p48 = por %p46, %p47
      %p49 = scmp.ne.s32.totalorder %s38, %s41
      %p50 = scmp.eq.s32.totalorder %s21, 1
      %p51 = por %p49, %p50
      %p52 = scmp.ne.s32.totalorder %s41, %s42
      %p53 = scmp.eq.s32.totalorder %s21, 0
      %p54 = por %p52, %p53
      %p55 = scmp.ne.s32.totalorder %s41, %s42
      %p56 = scmp.eq.s32.totalorder %s22, 1
      %p57 = por %p55, %p56
      %p59 = scmp.ne.s32.totalorder %s42, %s58
      %p60 = scmp.eq.s32.totalorder %s22, 0
      %p61 = por %p59, %p60
      %s62 = ssub.s32 %s24, %s31
      %s63 = ssub.s32 %s23, %s35
      %s64 = sor.u32 %s62, %s63
      %p65 = scmp.eq.s32.totalorder %s64, 0
      %s67 = sadd.s32 %s66, 1
      %s68 = scalar_select %p65, %s66, %s67
      %p71 = pneg %p65
      %p72 = scmp.eq.s32.totalorder %s16, 1
      %p73 = por %p71, %p72
      %p74 = scmp.ne.s32.totalorder %s66, %s69
      %p75 = scmp.eq.s32.totalorder %s16, 0
      %p76 = por %p74, %p75
      %p77 = scmp.ne.s32.totalorder %s66, %s69
      %p78 = scmp.eq.s32.totalorder %s21, 1
      %p79 = por %p77, %p78
      %p80 = scmp.ne.s32.totalorder %s69, %s70
      %p81 = scmp.eq.s32.totalorder %s21, 0
      %p82 = por %p80, %p81
      %p83 = scmp.ne.s32.totalorder %s69, %s70
      %p84 = scmp.eq.s32.totalorder %s22, 1
      %p85 = por %p83, %p84
      %p87 = scmp.ne.s32.totalorder %s70, %s86
      %p88 = scmp.eq.s32.totalorder %s22, 0
      %p89 = por %p87, %p88
      %s90 = ssub.s32 %s23, %s35
      %p91 = scmp.eq.s32.totalorder %s90, 0
      %s93 = sadd.s32 %s92, 1
      %s94 = scalar_select %p91, %s92, %s93
      %p97 = pneg %p91
      %p98 = scmp.eq.s32.totalorder %s16, 1
      %p99 = por %p97, %p98
      %p100 = scmp.ne.s32.totalorder %s92, %s95
      %p101 = scmp.eq.s32.totalorder %s16, 0
      %p102 = por %p100, %p101
      %p103 = scmp.ne.s32.totalorder %s92, %s95
      %p104 = scmp.eq.s32.totalorder %s21, 1
      %p105 = por %p103, %p104
      %p106 = scmp.ne.s32.totalorder %s95, %s96
      %p107 = scmp.eq.s32.totalorder %s21, 0
      %p108 = por %p106, %p107
      %p109 = scmp.ne.s32.totalorder %s95, %s96
      %p110 = scmp.eq.s32.totalorder %s22, 1
      %p111 = por %p109, %p110
      %p113 = scmp.ne.s32.totalorder %s96, %s112
      %p114 = scmp.eq.s32.totalorder %s22, 0
      %p115 = por %p113, %p114
      %s116 = ssub.s32 %s23, %s35
      %p117 = scmp.eq.s32.totalorder %s116, 0
      %s119 = sadd.s32 %s118, 1
      %s120 = scalar_select %p117, %s118, %s119
      %p123 = pneg %p117
      %p124 = scmp.eq.s32.totalorder %s16, 1
      %p125 = por %p123, %p124
      %p126 = scmp.ne.s32.totalorder %s118, %s121
      %p127 = scmp.eq.s32.totalorder %s16, 0
      %p128 = por %p126, %p127
      %p129 = scmp.ne.s32.totalorder %s118, %s121
      %p130 = scmp.eq.s32.totalorder %s21, 1
      %p131 = por %p129, %p130
      %p132 = scmp.ne.s32.totalorder %s121, %s122
      %p133 = scmp.eq.s32.totalorder %s21, 0
      %p134 = por %p132, %p133
      %p135 = scmp.ne.s32.totalorder %s121, %s122
      %p136 = scmp.eq.s32.totalorder %s22, 1
      %p137 = por %p135, %p136
      %p139 = scmp.ne.s32.totalorder %s122, %s138
      %p140 = scmp.eq.s32.totalorder %s22, 0
      %p141 = por %p139, %p140
      %p142 = scmp.le.s32.totalorder 1, %s16
      %p143 = scmp.lt.s32.totalorder %s16, 3
      %p144 = pnand %p142, %p143
      %p145 = pneg %p144
      // Predicated region
      $region9: #{tpu_custom_call.1} parent=5 // pred_check
        _
      $region10: #{tpu_custom_call.1} parent=5 // pred_check_branch
        %147 = sbr.rel (%p144) target = $region12
      $region11: #{tpu_custom_call.1} parent=5 // pred_region
        %s148 = ssub.s32 %s16, 1
        // Predicated region
        $region13: #{tpu_custom_call.1} parent=11 // pred_check
          %p149 = pneg %p54
        $region14: #{tpu_custom_call.1} parent=11 // pred_check_branch
          %151 = sbr.rel (%p149) target = $region16
        $region15: #{tpu_custom_call.1} parent=11 // pred_region
          %s153 = ssub.s32 64, 64
          %154 = vsyncadd [#allocation4], %s153
          %s155 = smul.addr %s26, 64
          %s156 = scalar_lea.hbm %s0, %s155
          %s158 = sshll.u32 [#allocation3], 4
          %s159 = int_to_ptr.vmem [resolvable:$true] %s158
          %161 = dma.hbm_to_vmem [thread:$0]  %s156, 64, %s159, [#allocation4]
        $region16: #{tpu_custom_call.1} parent=11 // pred_fallthru
          _
      $region12: #{tpu_custom_call.1} parent=5 // pred_fallthru
        _
      %p162 = scmp.lt.s32.totalorder %s16, 2
      // Predicated region
      $region17: #{tpu_custom_call.1} parent=5 // pred_check
        %p163 = pneg %p162
      $region18: #{tpu_custom_call.1} parent=5 // pred_check_branch
        %165 = sbr.rel (%p163) target = $region20
      $region19: #{tpu_custom_call.1} parent=5 // pred_region
        // Predicated region
        $region21: #{tpu_custom_call.1} parent=19 // pred_check
          %p166 = pneg %p76
        $region22: #{tpu_custom_call.1} parent=19 // pred_check_branch
          %168 = sbr.rel (%p166) target = $region24
        $region23: #{tpu_custom_call.1} parent=19 // pred_region
          %s169 = sand.u32 %s66, 1
          %s170 = scalar_lea.sflag [#allocation7], %s169
          %s171 = sand.u32 %s66, 1
          %s172 = smul.addr %s171, 16
          %s173 = scalar_lea.vmem [#allocation6], %s172
          %s174 = smul.u32 4, %s24
          %s176 = ssub.s32 256, 256
          %177 = vsyncadd %s170, %s176
          %s178 = smul.addr %s174, 2
          %s179 = sadd.s32 %s23, %s178
          %s180 = smul.addr %s179, 64
          %s181 = scalar_lea.hbm %s1, %s180
          %s182 = sshll.u32 %s173, 4
          %s183 = int_to_ptr.vmem [resolvable:$true] %s182
          %188 = dma.hbm_to_vmem [thread:$0]  %s181, 256, %s183, %s170, 128, 64, 4
        $region24: #{tpu_custom_call.1} parent=19 // pred_fallthru
          _
        // Predicated region
        $region25: #{tpu_custom_call.1} parent=19 // pred_check
          %p189 = pneg %p102
        $region26: #{tpu_custom_call.1} parent=19 // pred_check_branch
          %191 = sbr.rel (%p189) target = $region28
        $region27: #{tpu_custom_call.1} parent=19 // pred_region
          %p192 = scmp.lt.s32.totalorder %s23, 1
          %s193 = scalar_select %p192, %s23, 1
          %s194 = smul.addr %s193, 2
          %s195 = scalar_lea.vmem %s2, %s194
        $region28: #{tpu_custom_call.1} parent=19 // pred_fallthru
          _
      $region20: #{tpu_custom_call.1} parent=5 // pred_fallthru
        _
      %p196 = scmp.le.s32.totalorder 1, %s16
      %p197 = scmp.lt.s32.totalorder %s16, 3
      %p198 = pnand %p196, %p197
      %p199 = pneg %p198
      // Predicated region
      $region29: #{tpu_custom_call.1} parent=5 // pred_check
        _
      $region30: #{tpu_custom_call.1} parent=5 // pred_check_branch
        %201 = sbr.rel (%p198) target = $region32
      $region31: #{tpu_custom_call.1} parent=5 // pred_region
        %s202 = ssub.s32 %s16, 1
        // Predicated region
        $region33: #{tpu_custom_call.1} parent=31 // pred_check
          %p203 = pneg %p54
        $region34: #{tpu_custom_call.1} parent=31 // pred_check_branch
          %205 = sbr.rel (%p203) target = $region36
        $region35: #{tpu_custom_call.1} parent=31 // pred_region
          %206 = dma.done [#allocation4], 64
        $region36: #{tpu_custom_call.1} parent=31 // pred_fallthru
          _
        %s207 = sand.u32 %s69, 1
        %s208 = scalar_lea.sflag [#allocation7], %s207
        %s209 = sand.u32 %s69, 1
        %s210 = smul.addr %s209, 16
        %s211 = scalar_lea.vmem [#allocation6], %s210
        // Predicated region
        $region37: #{tpu_custom_call.1} parent=31 // pred_check
          %p212 = pneg %p82
        $region38: #{tpu_custom_call.1} parent=31 // pred_check_branch
          %214 = sbr.rel (%p212) target = $region40
        $region39: #{tpu_custom_call.1} parent=31 // pred_region
          %215 = dma.done %s208, 256
        $region40: #{tpu_custom_call.1} parent=31 // pred_fallthru
          _
        %p216 = pneg %p54
        %p217 = pneg %p51
        %s218 = sand.u32 %s69, 1
        %s219 = scalar_lea.sflag [#allocation7], %s218
        %s220 = sand.u32 %s69, 1
        %s221 = smul.addr %s220, 16
        %s222 = scalar_lea.vmem [#allocation6], %s221
        %p223 = pneg %p82
        %p224 = pneg %p79
        %p225 = scmp.lt.s32.totalorder %s25, 1
        %s226 = scalar_select %p225, %s25, 1
        %s227 = smul.addr %s226, 2
        %s228 = scalar_lea.vmem %s2, %s227
        %p229 = pneg %p108
        %p230 = pneg %p105
        %p231 = pneg %p134
        %p232 = pneg %p131
        %s233 = sand.u32 %s121, 1
        %s234 = scalar_lea.sflag [#allocation5], %s233
        %s235 = sand.u32 %s121, 1
        %s236 = smul.addr %s235, 8
        %s237 = scalar_lea.vmem [#allocation8], %s236
        %s238 = smul.u32 4, %s26
        %p239 = scmp.lt.s32.totalorder %s25, 1
        %s240 = scalar_select %p239, %s25, 1
        %s241 = smul.addr %s240, 2
        %s242 = scalar_lea.vmem %s2, %s241
        %p244 = scmp.eq.s32.totalorder %s26, 0
        // Predicated region
        $region41: #{tpu_custom_call.1} parent=31 // pred_check
          %p245 = pneg %p244
        $region42: #{tpu_custom_call.1} parent=31 // pred_check_branch
          %247 = sbr.rel (%p245) target = $region44
        $region43: #{tpu_custom_call.1} parent=31 // pred_region
          %248 = vst [vmem:[#allocation2] sm:$0xff] 0.0
        $region44: #{tpu_custom_call.1} parent=31 // pred_fallthru
          _
        %v249 = vld [vmem:[#allocation2] sm:$0xff]
        %v250 = vld [vmem:[#allocation3] sm:$0xf]
        %v251 = vld [vmem:[%s211] sm:$0xf]
        %v252 = vld [vmem:[%s211 + $0x4] sm:$0xf]
        %v253 = vld [vmem:[%s211 + $0x8] sm:$0xf]
        %v254 = vld [vmem:[%s211 + $0xc] sm:$0xf]
        %v259 = vunpack.c.l.b16 %v251
        %v260 = vunpack.c.l.b16 %v252
        %v261 = vunpack.c.l.b16 %v253
        %v262 = vunpack.c.l.b16 %v254
        %v263 = vpack.c.b16 %v260, %v259
        %v264 = vpack.c.b16 %v262, %v261
        %vm267 = vcmask 261120
        %v269 = vsel %vm267, %v250, 0
        %271 = vmatprep.subr.bf16.mxu0 0
        %272 = vmatpush1.bf16.msra.mxu0 %v263
        %273 = vmatprep.subr.bf16.mxu0 0
        %274 = vmatpush1.bf16.msra.mxu0 %v264
        %275 = vmatprep.subr.bf16.mxu0 0
        %276 = vmatpush1.bf16.msra.mxu0 0
        %277 = vmatprep.subr.bf16.mxu0 0
        %278 = vmatpush1.bf16.msra.mxu0 0
        %279 = vmatprep.subr.bf16.mxu0 0
        %280 = vmatpush1.bf16.msra.mxu0 0
        %281 = vmatprep.subr.bf16.mxu0 0
        %282 = vmatpush1.bf16.msra.mxu0 0
        %283 = vmatprep.subr.bf16.mxu0 0
        %284 = vmatpush1.bf16.msra.mxu0 0
        %285 = vmatprep.subr.bf16.mxu0 0
        %286 = vmatpush1.bf16.msra.mxu0 0
        %287 = vmatprep.subr.bf16.mxu0 0
        %288 = vmatpush1.bf16.msra.mxu0 0
        %289 = vmatprep.subr.bf16.mxu0 0
        %290 = vmatpush1.bf16.msra.mxu0 0
        %291 = vmatprep.subr.bf16.mxu0 0
        %292 = vmatpush1.bf16.msra.mxu0 0
        %293 = vmatprep.subr.bf16.mxu0 0
        %294 = vmatpush1.bf16.msra.mxu0 0
        %295 = vmatprep.subr.bf16.mxu0 0
        %296 = vmatpush1.bf16.msra.mxu0 0
        %297 = vmatprep.subr.bf16.mxu0 0
        %298 = vmatpush1.bf16.msra.mxu0 0
        %299 = vmatprep.subr.bf16.mxu0 0
        %300 = vmatpush1.bf16.msra.mxu0 0
        %301 = vmatprep.subr.bf16.mxu0 0
        %302 = vmatpush1.bf16.msra.mxu0 0
        %303 = vmatprep.mubr.bf16.mxu0 0
        %304 = vmatmul.mubr.bf16.gmra.mrb[0].mxu0 %v269
        %v305 = vpop.f32.mrb[0].mxu0
        %v306 = vadd.f32 0.0, %v305
        %v307 = vpop.f32.mrb[0].mxu0
        %v308 = vpop.f32.mrb[0].mxu0
        %v309 = vpop.f32.mrb[0].mxu0
        %310 = vdwg.mxu0
        %v311 = vadd.f32 %v249, %v306
        %312 = vst [vmem:[#allocation2] sm:$0xff] %v311
        // Predicated region
        $region45: #{tpu_custom_call.1} parent=31 // pred_check
          %p313 = pneg %p244
        $region46: #{tpu_custom_call.1} parent=31 // pred_check_branch
          %315 = sbr.rel (%p313) target = $region48
        $region47: #{tpu_custom_call.1} parent=31 // pred_region
          %v316 = vld [vmem:[#allocation2] sm:$0xff]
          %v317 = vrot.slane %v316, 4
          %v318 = vadd.f32 %v316, %v317
          %v319 = vrot.slane %v318, 2
          %v320 = vadd.f32 %v318, %v319
          %v321 = vrot.slane %v320, 1
          %v322 = vadd.f32 %v320, %v321
          %v323 = vmul.f32 %v322, 0.125
          %v324 = vsub.f32 %v316, %v323
          %v325 = vmul.f32 %v324, %v324
          %v326 = vrot.slane %v325, 4
          %v327 = vadd.f32 %v325, %v326
          %v328 = vrot.slane %v327, 2
          %v329 = vadd.f32 %v327, %v328
          %v330 = vrot.slane %v329, 1
          %v331 = vadd.f32 %v329, %v330
          %v332 = vmul.f32 %v331, 0.125
          %v333 = vld [vmem:[%s242] sm:$0x1]
          %v334 = vadd.f32 %v332, 1e-05
          %v335 = vrsqrt.pop %v334
          %v336 = vmul.f32 %v333, %v335
          %v337 = vlaneseq
          %v338 = vshrl.u32 %v337, 7
          %v339 = vsub.s32 0, %v338
          %v340 = vrot.slane %v336, %v339
          %v341 = vmul.f32 %v324, %v340
          %v342 = vld [vmem:[%s242 + $0x1] sm:$0x1]
          %v343 = vlaneseq
          %v344 = vshrl.u32 %v343, 7
          %v345 = vsub.s32 0, %v344
          %v346 = vrot.slane %v342, %v345
          %v347 = vadd.f32 %v341, %v346
          %348 = vst [vmem:[%s237] sm:$0xff] %v347
        $region48: #{tpu_custom_call.1} parent=31 // pred_fallthru
          _
        %s349 = sand.u32 %s121, 1
        %s350 = scalar_lea.sflag [#allocation5], %s349
        %s351 = sand.u32 %s121, 1
        %s352 = smul.addr %s351, 8
        %s353 = scalar_lea.vmem [#allocation8], %s352
        // Predicated region
        $region49: #{tpu_custom_call.1} parent=31 // pred_check
          %p354 = pneg %p131
        $region50: #{tpu_custom_call.1} parent=31 // pred_check_branch
          %356 = sbr.rel (%p354) target = $region52
        $region51: #{tpu_custom_call.1} parent=31 // pred_region
          %s358 = ssub.s32 128, 128
          %359 = vsyncadd %s350, %s358
          %s360 = smul.addr %s25, 128
          %s361 = scalar_lea.hbm %s3, %s360
          %s363 = sshll.u32 %s353, 4
          %s364 = int_to_ptr.vmem [resolvable:$true] %s363
          %366 = dma.vmem_to_hbm [thread:$0]  %s364, 128, %s361, %s350
        $region52: #{tpu_custom_call.1} parent=31 // pred_fallthru
          _
      $region32: #{tpu_custom_call.1} parent=5 // pred_fallthru
        _
      %p367 = scmp.le.s32.totalorder 2, %s16
      // Predicated region
      $region53: #{tpu_custom_call.1} parent=5 // pred_check
        %p368 = pneg %p367
      $region54: #{tpu_custom_call.1} parent=5 // pred_check_branch
        %370 = sbr.rel (%p368) target = $region56
      $region55: #{tpu_custom_call.1} parent=5 // pred_region
        %s371 = ssub.s32 %s16, 2
        // Predicated region
        $region57: #{tpu_custom_call.1} parent=55 // pred_check
          %p372 = pneg %p137
        $region58: #{tpu_custom_call.1} parent=55 // pred_check_branch
          %374 = sbr.rel (%p372) target = $region60
        $region59: #{tpu_custom_call.1} parent=55 // pred_region
          %s375 = sand.u32 %s122, 1
          %s376 = scalar_lea.sflag [#allocation5], %s375
          %s377 = sand.u32 %s122, 1
          %s378 = smul.addr %s377, 8
          %s379 = scalar_lea.vmem [#allocation8], %s378
          %380 = dma.done %s376, 128
        $region60: #{tpu_custom_call.1} parent=55 // pred_fallthru
          _
      $region56: #{tpu_custom_call.1} parent=5 // pred_fallthru
        _
    $region6: #{tpu_custom_call.1} parent=1 // loop_footer
      %s20 = sadd.s32 1, %s16
    $region7: #{tpu_custom_call.1} parent=1 // loop_footer_branch
      %15 = sbr.rel target = $region3
    $region8: #{tpu_custom_call.1} parent=1 // loop_exit
      _
    %381 = vsyncpa [#allocation4], 1
    %s382 = scalar_lea.sflag [#allocation4], 1
    %383 = vsyncpa %s382, 1
    %384 = vsyncpa [#allocation7], 1
    %s385 = scalar_lea.sflag [#allocation7], 1
    %386 = vsyncpa %s385, 1
    %387 = vsyncpa [#allocation5], 1
    %s388 = scalar_lea.sflag [#allocation5], 1
    %389 = vsyncpa %s388, 1

</llo_original>
